<compile_context>
chip_gen: v5e
topology: v5e:2x2
jax: 0.10.0
libtpu: 0.0.40
codegen_flags: <defaults>
</compile_context>

<pallas_src>
import jax
import jax.numpy as jnp
import numpy as np
from jax.experimental import pallas as pl
from jax.experimental.pallas import tpu as pltpu


_SENTINEL = 1.0e8  # pad coordinate: distance to any real point is ~3e16 (never the min)


def _round_up(x, m):
    return ((x + m - 1) // m) * m


def _chamfer_kernel(x1_ref, x2t_ref, d1_ref, d2_ref):
    # x1_ref : (1, tn, 3)   current n-tile, points on sublanes, xyz on lanes
    # x2t_ref: (1, 3, tm)   current m-tile, xyz on sublanes, points on lanes
    # d1_ref : (1, tn, 1)   dist1 accumulator, resident across the m-axis
    # d2_ref : (1, 1, Mp)   dist2 accumulator (lane-dense), resident per batch
    ni = pl.program_id(1)
    mi = pl.program_id(2)

    x1 = x1_ref[0]    # (tn, 3)
    x2t = x2t_ref[0]  # (3, tm)
    tm = x2t.shape[1]

    # Pairwise squared distances on the VPU, one coordinate at a time:
    #   d[n, m] = sum_k (x1[n, k] - x2[m, k])^2            shape (tn, tm)
    # (tn,1) operands get a lane-replicated layout and (1,tm) operands a
    # sublane-replicated layout, so the broadcasts are amortised per vreg row/col.
    d = None
    for k in range(3):
        diff = x1[:, k:k + 1] - x2t[k:k + 1, :]            # (tn,1) - (1,tm) -> (tn,tm)
        sq = diff * diff
        d = sq if d is None else d + sq

    # ---- dist1: running min over m, accumulated directly in the output block ----
    @pl.when(mi == 0)
    def _():
        d1_ref[...] = jnp.full_like(d1_ref, jnp.inf)

    d1_ref[...] = jnp.minimum(d1_ref[...],
                              jnp.min(d, axis=1, keepdims=True)[None])   # (1,tn,1)

    # ---- dist2: running min over n, accumulated directly in the per-batch slab ----
    @pl.when((ni == 0) & (mi == 0))
    def _():
        d2_ref[...] = jnp.full_like(d2_ref, jnp.inf)

    off = pl.multiple_of(mi * tm, 128)
    cur = d2_ref[:, :, pl.ds(off, tm)]                                    # (1,1,tm)
    d2_ref[:, :, pl.ds(off, tm)] = jnp.minimum(
        cur, jnp.min(d, axis=0, keepdims=True)[None])                     # (1,1,tm)


def chamfer_pairwise_min(xyz1, xyz2, *, tile_n=512, tile_m=512):
    """Returns (dist1, dist2) with shapes (B, N) and (B, M), float32."""
    B, N, C = xyz1.shape
    _, M, C2 = xyz2.shape
    assert C == 3 and C2 == 3, "point clouds must be (B, num_points, 3)"

    xyz1 = xyz1.astype(jnp.float32)
    xyz2 = xyz2.astype(jnp.float32)

    # Pad point counts to multiples of 128, pick 128-multiple tiles that divide them.
    def pick_tile(requested, padded):
        t = max(128, (int(requested) // 128) * 128)
        return min(t, padded)

    n_pad = _round_up(N, 128)
    m_pad = _round_up(M, 128)
    tn = pick_tile(tile_n, n_pad)
    tm = pick_tile(tile_m, m_pad)
    n_pad = _round_up(n_pad, tn)
    m_pad = _round_up(m_pad, tm)

    if n_pad != N:
        xyz1 = jnp.concatenate(
            [xyz1, jnp.full((B, n_pad - N, 3), _SENTINEL, jnp.float32)], axis=1)
    if m_pad != M:
        xyz2 = jnp.concatenate(
            [xyz2, jnp.full((B, m_pad - M, 3), _SENTINEL, jnp.float32)], axis=1)

    # Layout plumbing: xyz2 -> (B, 3, Mp) so m-points live on the 128-lane axis.
    xyz2_t = jnp.transpose(xyz2, (0, 2, 1))

    n_tiles = n_pad // tn
    m_tiles = m_pad // tm

    flops = 10 * B * n_pad * m_pad  # 8 for dist + 2 for the two running mins
    bytes_accessed = 4 * (B * n_pad * 3 + B * n_tiles * m_pad * 3
                          + B * n_pad + B * m_pad)

    dist1, dist2 = pl.pallas_call(
        _chamfer_kernel,
        out_shape=(
            jax.ShapeDtypeStruct((B, n_pad, 1), jnp.float32),
            jax.ShapeDtypeStruct((B, 1, m_pad), jnp.float32),
        ),
        grid_spec=pltpu.PrefetchScalarGridSpec(
            num_scalar_prefetch=0,
            grid=(B, n_tiles, m_tiles),
            in_specs=[
                pl.BlockSpec((1, tn, 3), lambda b, ni, mi: (b, ni, 0)),
                pl.BlockSpec((1, 3, tm), lambda b, ni, mi: (b, 0, mi)),
            ],
            out_specs=[
                pl.BlockSpec((1, tn, 1), lambda b, ni, mi: (b, ni, 0)),
                pl.BlockSpec((1, 1, m_pad), lambda b, ni, mi: (b, 0, 0)),
            ],
        ),
        compiler_params=pltpu.CompilerParams(
            dimension_semantics=("parallel", "arbitrary", "arbitrary"),
        ),
        cost_estimate=pl.CostEstimate(
            flops=flops, transcendentals=0, bytes_accessed=bytes_accessed),
    )(xyz1, xyz2_t)

    return dist1[:, :N, 0], dist2[:, 0, :M]


def chamfer_distance(xyz1, xyz2, norm="L2", ignore_zeros=False,
                     tile_n=512, tile_m=512):
    """JAX/Pallas equivalent of ChamferDistance.forward."""
    # TODO(synk): ignore_zeros filtering (batch==1) is data-dependent shape
    # manipulation with no static-shape Pallas equivalent; skipped here.
    dist1, dist2 = chamfer_pairwise_min(xyz1, xyz2, tile_n=tile_n, tile_m=tile_m)
    if norm == "L2":
        return jnp.mean(dist1) + jnp.mean(dist2)
    elif norm == "L1":
        return (jnp.mean(jnp.sqrt(dist1)) + jnp.mean(jnp.sqrt(dist2))) / 2.0
    else:
        raise ValueError(f"unknown norm {norm}")


def _reference_chamfer(xyz1, xyz2, norm="L2"):
    # Pure-JAX reference for validation.
    diff = xyz1[:, :, None, :] - xyz2[:, None, :, :]          # (B, N, M, 3)
    d = jnp.sum(diff * diff, axis=-1)                          # (B, N, M)
    dist1 = jnp.min(d, axis=2)
    dist2 = jnp.min(d, axis=1)
    if norm == "L2":
        return jnp.mean(dist1) + jnp.mean(dist2)
    return (jnp.mean(jnp.sqrt(dist1)) + jnp.mean(jnp.sqrt(dist2))) / 2.0


if __name__ == "__main__":
    key = jax.random.PRNGKey(0)
    k1, k2 = jax.random.split(key)

    # Non-multiple-of-128 sizes exercise sentinel padding; small tiles exercise
    # the multi-tile running-min path (grid = (2, 2, 3)).
    B, N, M = 2, 200, 300
    xyz1 = jax.random.normal(k1, (B, N, 3), dtype=jnp.float32)
    xyz2 = jax.random.normal(k2, (B, M, 3), dtype=jnp.float32)

    out_l2 = jax.block_until_ready(
        chamfer_distance(xyz1, xyz2, norm="L2", tile_n=128, tile_m=128))
    out_l1 = jax.block_until_ready(
        chamfer_distance(xyz1, xyz2, norm="L1", tile_n=128, tile_m=128))
    # Default (large) tiles -> single-tile-per-axis path.
    out_l2_big = jax.block_until_ready(chamfer_distance(xyz1, xyz2, norm="L2"))

    ref_l2 = _reference_chamfer(xyz1, xyz2, norm="L2")
    ref_l1 = _reference_chamfer(xyz1, xyz2, norm="L1")

    np.testing.assert_allclose(np.asarray(out_l2), np.asarray(ref_l2),
                               rtol=1e-5, atol=1e-5)
    np.testing.assert_allclose(np.asarray(out_l1), np.asarray(ref_l1),
                               rtol=1e-5, atol=1e-5)
    np.testing.assert_allclose(np.asarray(out_l2_big), np.asarray(ref_l2),
                               rtol=1e-5, atol=1e-5)

    print("KERNEL_OK")
</pallas_src>

<mosaic_0001>
module attributes {stable_mosaic.version = 11 : i64} {
  func.func @_chamfer_kernel(%arg0: i32, %arg1: i32, %arg2: i32, %arg3: memref<1x128x3xf32, #tpu.memory_space<vmem>>, %arg4: memref<1x3x128xf32, #tpu.memory_space<vmem>>, %arg5: memref<1x128x1xf32, #tpu.memory_space<vmem>>, %arg6: memref<1x1x384xf32, #tpu.memory_space<vmem>>) attributes {dimension_semantics = [#tpu.dimension_semantics<parallel>, #tpu.dimension_semantics<arbitrary>, #tpu.dimension_semantics<arbitrary>], iteration_bounds = array<i64: 2, 2, 3>, scalar_prefetch = 0 : i64, scratch_operands = 0 : i64, tpu.core_type = #tpu.core_type<tc>, window_params = [{transform_indices = @transform_0, window_bounds = array<i64: 1, 128, 3>}, {transform_indices = @transform_1, window_bounds = array<i64: 1, 3, 128>}, {transform_indices = @transform_2, window_bounds = array<i64: 1, 128, 1>}, {transform_indices = @transform_3, window_bounds = array<i64: 1, 1, 384>}]} {
    %c0 = arith.constant 0 : index
    %c0_0 = arith.constant 0 : index
    %c0_1 = arith.constant 0 : index
    %0 = vector.load %arg3[%c0, %c0_0, %c0_1] : memref<1x128x3xf32, #tpu.memory_space<vmem>>, vector<1x128x3xf32>
    %1 = vector.shape_cast %0 : vector<1x128x3xf32> to vector<128x3xf32>
    %c0_2 = arith.constant 0 : index
    %c0_3 = arith.constant 0 : index
    %c0_4 = arith.constant 0 : index
    %2 = vector.load %arg4[%c0_2, %c0_3, %c0_4] : memref<1x3x128xf32, #tpu.memory_space<vmem>>, vector<1x3x128xf32>
    %3 = vector.shape_cast %2 : vector<1x3x128xf32> to vector<3x128xf32>
    %4 = vector.extract_strided_slice %1 {offsets = [0, 0], sizes = [128, 1], strides = [1, 1]} : vector<128x3xf32> to vector<128x1xf32>
    %5 = vector.extract_strided_slice %3 {offsets = [0, 0], sizes = [1, 128], strides = [1, 1]} : vector<3x128xf32> to vector<1x128xf32>
    %6 = vector.broadcast %4 : vector<128x1xf32> to vector<128x128xf32>
    %7 = vector.broadcast %5 : vector<1x128xf32> to vector<128x128xf32>
    %8 = arith.subf %6, %7 : vector<128x128xf32>
    %9 = arith.mulf %8, %8 : vector<128x128xf32>
    %10 = vector.extract_strided_slice %1 {offsets = [0, 1], sizes = [128, 1], strides = [1, 1]} : vector<128x3xf32> to vector<128x1xf32>
    %11 = vector.extract_strided_slice %3 {offsets = [1, 0], sizes = [1, 128], strides = [1, 1]} : vector<3x128xf32> to vector<1x128xf32>
    %12 = vector.broadcast %10 : vector<128x1xf32> to vector<128x128xf32>
    %13 = vector.broadcast %11 : vector<1x128xf32> to vector<128x128xf32>
    %14 = arith.subf %12, %13 : vector<128x128xf32>
    %15 = arith.mulf %14, %14 : vector<128x128xf32>
    %16 = arith.addf %9, %15 : vector<128x128xf32>
    %17 = vector.extract_strided_slice %1 {offsets = [0, 2], sizes = [128, 1], strides = [1, 1]} : vector<128x3xf32> to vector<128x1xf32>
    %18 = vector.extract_strided_slice %3 {offsets = [2, 0], sizes = [1, 128], strides = [1, 1]} : vector<3x128xf32> to vector<1x128xf32>
    %19 = vector.broadcast %17 : vector<128x1xf32> to vector<128x128xf32>
    %20 = vector.broadcast %18 : vector<1x128xf32> to vector<128x128xf32>
    %21 = arith.subf %19, %20 : vector<128x128xf32>
    %22 = arith.mulf %21, %21 : vector<128x128xf32>
    %23 = arith.addf %16, %22 : vector<128x128xf32>
    %c0_i32 = arith.constant 0 : i32
    %24 = arith.cmpi eq, %arg2, %c0_i32 : i32
    %25 = arith.extui %24 : i1 to i32
    %c0_i32_5 = arith.constant 0 : i32
    %26 = arith.cmpi ne, %25, %c0_i32_5 : i32
    scf.if %26 {
      %cst_20 = arith.constant 0x7F800000 : f32
      %48 = vector.broadcast %cst_20 : f32 to vector<1x128x1xf32>
      %c0_21 = arith.constant 0 : index
      %c0_22 = arith.constant 0 : index
      %c0_23 = arith.constant 0 : index
      %49 = vector.load %arg5[%c0_21, %c0_22, %c0_23] : memref<1x128x1xf32, #tpu.memory_space<vmem>>, vector<1x128x1xf32>
      tpu.vector_store %arg5[%c0_21, %c0_22, %c0_23], %48 {strides = array<i32>} : memref<1x128x1xf32, #tpu.memory_space<vmem>>, vector<1x128x1xf32>,
    } else {
    }
    %c0_6 = arith.constant 0 : index
    %c0_7 = arith.constant 0 : index
    %c0_8 = arith.constant 0 : index
    %27 = vector.load %arg5[%c0_6, %c0_7, %c0_8] : memref<1x128x1xf32, #tpu.memory_space<vmem>>, vector<1x128x1xf32>
    %cst = arith.constant dense<0x7F800000> : vector<128xf32>
    %28 = vector.multi_reduction <minimumf>, %23, %cst [1] : vector<128x128xf32> to vector<128xf32>
    %29 = vector.shape_cast %28 : vector<128xf32> to vector<128x1xf32>
    %30 = vector.shape_cast %29 : vector<128x1xf32> to vector<1x128x1xf32>
    %31 = arith.minimumf %27, %30 : vector<1x128x1xf32>
    %c0_9 = arith.constant 0 : index
    %c0_10 = arith.constant 0 : index
    %c0_11 = arith.constant 0 : index
    %32 = vector.load %arg5[%c0_9, %c0_10, %c0_11] : memref<1x128x1xf32, #tpu.memory_space<vmem>>, vector<1x128x1xf32>
    tpu.vector_store %arg5[%c0_9, %c0_10, %c0_11], %31 {strides = array<i32>} : memref<1x128x1xf32, #tpu.memory_space<vmem>>, vector<1x128x1xf32>,
    %c0_i32_12 = arith.constant 0 : i32
    %33 = arith.cmpi eq, %arg1, %c0_i32_12 : i32
    %c0_i32_13 = arith.constant 0 : i32
    %34 = arith.cmpi eq, %arg2, %c0_i32_13 : i32
    %35 = arith.andi %33, %34 : i1
    %36 = arith.extui %35 : i1 to i32
    %c0_i32_14 = arith.constant 0 : i32
    %37 = arith.cmpi ne, %36, %c0_i32_14 : i32
    scf.if %37 {
      %cst_20 = arith.constant 0x7F800000 : f32
      %48 = vector.broadcast %cst_20 : f32 to vector<1x1x384xf32>
      %c0_21 = arith.constant 0 : index
      %c0_22 = arith.constant 0 : index
      %c0_23 = arith.constant 0 : index
      %49 = vector.load %arg6[%c0_21, %c0_22, %c0_23] : memref<1x1x384xf32, #tpu.memory_space<vmem>>, vector<1x1x384xf32>
      tpu.vector_store %arg6[%c0_21, %c0_22, %c0_23], %48 {strides = array<i32>} : memref<1x1x384xf32, #tpu.memory_space<vmem>>, vector<1x1x384xf32>,
    } else {
    }
    %c128_i32 = arith.constant 128 : i32
    %38 = arith.muli %arg2, %c128_i32 : i32
    %39 = tpu.assume_multiple %38, 128 : i32
    %c0_15 = arith.constant 0 : index
    %c0_16 = arith.constant 0 : index
    %40 = arith.index_cast %39 : i32 to index
    %41 = vector.load %arg6[%c0_15, %c0_16, %40] : memref<1x1x384xf32, #tpu.memory_space<vmem>>, vector<1x1x128xf32>
    %cst_17 = arith.constant dense<0x7F800000> : vector<128xf32>
    %42 = vector.multi_reduction <minimumf>, %23, %cst_17 [0] : vector<128x128xf32> to vector<128xf32>
    %43 = vector.shape_cast %42 : vector<128xf32> to vector<1x128xf32>
    %44 = vector.shape_cast %43 : vector<1x128xf32> to vector<1x1x128xf32>
    %45 = arith.minimumf %41, %44 : vector<1x1x128xf32>
    %c0_18 = arith.constant 0 : index
    %c0_19 = arith.constant 0 : index
    %46 = arith.index_cast %39 : i32 to index
    %47 = vector.load %arg6[%c0_18, %c0_19, %46] : memref<1x1x384xf32, #tpu.memory_space<vmem>>, vector<1x1x128xf32>
    tpu.vector_store %arg6[%c0_18, %c0_19, %46], %45 {strides = array<i32>} : memref<1x1x384xf32, #tpu.memory_space<vmem>>, vector<1x1x128xf32>,
    return
  }
  func.func @transform_0(%arg0: i32, %arg1: i32, %arg2: i32) -> (i32, i32, i32) {
    %c0_i32 = arith.constant 0 : i32
    %c0_i32_0 = arith.constant 0 : i32
    return %arg0, %arg1, %c0_i32 : i32, i32, i32
  }
  func.func @transform_1(%arg0: i32, %arg1: i32, %arg2: i32) -> (i32, i32, i32) {
    %c0_i32 = arith.constant 0 : i32
    %c0_i32_0 = arith.constant 0 : i32
    return %arg0, %c0_i32, %arg2 : i32, i32, i32
  }
  func.func @transform_2(%arg0: i32, %arg1: i32, %arg2: i32) -> (i32, i32, i32) {
    %c0_i32 = arith.constant 0 : i32
    %c0_i32_0 = arith.constant 0 : i32
    return %arg0, %arg1, %c0_i32 : i32, i32, i32
  }
  func.func @transform_3(%arg0: i32, %arg1: i32, %arg2: i32) -> (i32, i32, i32) {
    %c0_i32 = arith.constant 0 : i32
    %c0_i32_0 = arith.constant 0 : i32
    %c0_i32_1 = arith.constant 0 : i32
    return %arg0, %c0_i32, %c0_i32_0 : i32, i32, i32
  }
}

</mosaic_0001>

<llo_original>
// kernel: tpu_custom_call.1
$region0: #{tpu_custom_call.1}
  #allocation0 [shape = 'u32[]', space=smem, size = 0x4, offset = 0x4, fixed_abs, tag = 'smem constant byte address 0x4 - core index']
  #allocation1 [shape = 'u32[72,128]{1,0:T(1,128)}', space=vmem, size = 0x9000, scoped, tag = 'internal scratch']
  %s0 = inlined_call_operand.vmem [shape: f32[2,256,3], index: 0, kind: input, shape index: {}]
  %s1 = inlined_call_operand.vmem [shape: f32[2,3,384], index: 1, kind: input, shape index: {}]
  %s2 = inlined_call_operand.vmem [shape: f32[2,256,1], index: 2, kind: output, shape index: {0}]
  %s3 = inlined_call_operand.hbm [shape: f32[2,1,384], index: 3, kind: output, shape index: {1}]
  %4 = xla_tuple %s2, %s3
  %s5 = sld [smem:[#allocation0]]
  $region57: #{tpu_custom_call.1} parent=0
    _
  %s7 = ssub.s32 1, %s5
  %s8 = scalar_select 0, %s7, %s5
  $region1: #{tpu_custom_call.1} parent=0
    #allocation2 [shape = 'u8[3072]{0}', space=vmem, size = 0xc00, scoped, tag = 'output window, operand 1']
    #allocation3 [shape = 's32[2]{0}', space=sflag, size = 0x8, scoped, tag = 'scoped memory for tpu_custom_call.1']
    %9 = vsyncpa [#allocation3], 0
    %s10 = scalar_lea.sflag [#allocation3], 1
    %11 = vsyncpa %s10, 0
    loop: start=0, step=1, limit=14
    $region2: #{tpu_custom_call.1} parent=1 // loop_pre_header
      _
    $region3: #{tpu_custom_call.1} parent=1 // loop_header
      %s13 = sphi 0, %s17
      %p14 = scmp.ge.s32.totalorder %s13, 14
      %s20 = sphi 0, %s39
      %s21 = sphi 0, %s35
      %s22 = sphi 0, %s31
      %s23 = sphi 0, %s20
      %s24 = sphi 0, %s21
      %s25 = sphi 0, %s22
      %s26 = sphi 0, %s23
      %s27 = sphi 0, %s24
      %s28 = sphi 0, %s25
      %s44 = sphi 0, %s46
      %s47 = sphi 0, %s44
      %s48 = sphi 0, %s47
      %s64 = sphi 0, %s48
      %s72 = sphi 0, %s74
      %s75 = sphi 0, %s72
      %s76 = sphi 0, %s75
      %s92 = sphi 0, %s76
      %s100 = sphi 0, %s102
      %s103 = sphi 0, %s100
      %s104 = sphi 0, %s103
      %s120 = sphi 0, %s104
      %s126 = sphi 0, %s128
      %s129 = sphi 0, %s126
      %s130 = sphi 0, %s129
      %s146 = sphi 0, %s130
    $region4: #{tpu_custom_call.1} parent=1 // loop_header_branch
      %16 = sbr.rel (%p14) target = $region8
    $region5: #{tpu_custom_call.1} parent=1 // loop_body
      %s18 = ssub.s32 %s13, 1
      %s19 = ssub.s32 %s13, 2
      %s29 = sadd.s32 1, %s22
      %p30 = scmp.ge.s32.totalorder %s29, 3
      %s31 = scalar_select %p30, 0, %s29
      %s32 = sadd.s32 1, %s21
      %s33 = scalar_select %p30, %s32, %s21
      %p34 = scmp.ge.s32.totalorder %s33, 2
      %s35 = scalar_select %p34, 0, %s33
      %s36 = sadd.s32 1, %s20
      %s37 = scalar_select %p34, %s36, %s20
      %p38 = scmp.ge.s32.totalorder %s37, 2
      %s39 = scalar_select %p38, 0, %s37
      %s40 = ssub.s32 %s20, %s39
      %s41 = ssub.s32 %s21, %s35
      %s42 = sor.u32 %s40, %s41
      %p43 = scmp.eq.s32.totalorder %s42, 0
      %s45 = sadd.s32 %s44, 1
      %s46 = scalar_select %p43, %s44, %s45
      %p49 = pneg %p43
      %p50 = scmp.eq.s32.totalorder %s13, 11
      %p51 = por %p49, %p50
      %p52 = scmp.ne.s32.totalorder %s44, %s47
      %p53 = scmp.eq.s32.totalorder %s13, 0
      %p54 = por %p52, %p53
      %p55 = scmp.ne.s32.totalorder %s44, %s47
      %p56 = scmp.eq.s32.totalorder %s18, 11
      %p57 = por %p55, %p56
      %p58 = scmp.ne.s32.totalorder %s47, %s48
      %p59 = scmp.eq.s32.totalorder %s18, 0
      %p60 = por %p58, %p59
      %p61 = scmp.ne.s32.totalorder %s47, %s48
      %p62 = scmp.eq.s32.totalorder %s19, 11
      %p63 = por %p61, %p62
      %p65 = scmp.ne.s32.totalorder %s48, %s64
      %p66 = scmp.eq.s32.totalorder %s19, 0
      %p67 = por %p65, %p66
      %s68 = ssub.s32 %s20, %s39
      %s69 = ssub.s32 %s22, %s31
      %s70 = sor.u32 %s68, %s69
      %p71 = scmp.eq.s32.totalorder %s70, 0
      %s73 = sadd.s32 %s72, 1
      %s74 = scalar_select %p71, %s72, %s73
      %p77 = pneg %p71
      %p78 = scmp.eq.s32.totalorder %s13, 11
      %p79 = por %p77, %p78
      %p80 = scmp.ne.s32.totalorder %s72, %s75
      %p81 = scmp.eq.s32.totalorder %s13, 0
      %p82 = por %p80, %p81
      %p83 = scmp.ne.s32.totalorder %s72, %s75
      %p84 = scmp.eq.s32.totalorder %s18, 11
      %p85 = por %p83, %p84
      %p86 = scmp.ne.s32.totalorder %s75, %s76
      %p87 = scmp.eq.s32.totalorder %s18, 0
      %p88 = por %p86, %p87
      %p89 = scmp.ne.s32.totalorder %s75, %s76
      %p90 = scmp.eq.s32.totalorder %s19, 11
      %p91 = por %p89, %p90
      %p93 = scmp.ne.s32.totalorder %s76, %s92
      %p94 = scmp.eq.s32.totalorder %s19, 0
      %p95 = por %p93, %p94
      %s96 = ssub.s32 %s20, %s39
      %s97 = ssub.s32 %s21, %s35
      %s98 = sor.u32 %s96, %s97
      %p99 = scmp.eq.s32.totalorder %s98, 0
      %s101 = sadd.s32 %s100, 1
      %s102 = scalar_select %p99, %s100, %s101
      %p105 = pneg %p99
      %p106 = scmp.eq.s32.totalorder %s13, 11
      %p107 = por %p105, %p106
      %p108 = scmp.ne.s32.totalorder %s100, %s103
      %p109 = scmp.eq.s32.totalorder %s13, 0
      %p110 = por %p108, %p109
      %p111 = scmp.ne.s32.totalorder %s100, %s103
      %p112 = scmp.eq.s32.totalorder %s18, 11
      %p113 = por %p111, %p112
      %p114 = scmp.ne.s32.totalorder %s103, %s104
      %p115 = scmp.eq.s32.totalorder %s18, 0
      %p116 = por %p114, %p115
      %p117 = scmp.ne.s32.totalorder %s103, %s104
      %p118 = scmp.eq.s32.totalorder %s19, 11
      %p119 = por %p117, %p118
      %p121 = scmp.ne.s32.totalorder %s104, %s120
      %p122 = scmp.eq.s32.totalorder %s19, 0
      %p123 = por %p121, %p122
      %s124 = ssub.s32 %s20, %s39
      %p125 = scmp.eq.s32.totalorder %s124, 0
      %s127 = sadd.s32 %s126, 1
      %s128 = scalar_select %p125, %s126, %s127
      %p131 = pneg %p125
      %p132 = scmp.eq.s32.totalorder %s13, 11
      %p133 = por %p131, %p132
      %p134 = scmp.ne.s32.totalorder %s126, %s129
      %p135 = scmp.eq.s32.totalorder %s13, 0
      %p136 = por %p134, %p135
      %p137 = scmp.ne.s32.totalorder %s126, %s129
      %p138 = scmp.eq.s32.totalorder %s18, 11
      %p139 = por %p137, %p138
      %p140 = scmp.ne.s32.totalorder %s129, %s130
      %p141 = scmp.eq.s32.totalorder %s18, 0
      %p142 = por %p140, %p141
      %p143 = scmp.ne.s32.totalorder %s129, %s130
      %p144 = scmp.eq.s32.totalorder %s19, 11
      %p145 = por %p143, %p144
      %p147 = scmp.ne.s32.totalorder %s130, %s146
      %p148 = scmp.eq.s32.totalorder %s19, 0
      %p149 = por %p147, %p148
      %p150 = scmp.le.s32.totalorder 1, %s13
      %p151 = scmp.lt.s32.totalorder %s13, 13
      %p152 = pnand %p150, %p151
      %p153 = pneg %p152
      // Predicated region
      $region9: #{tpu_custom_call.1} parent=5 // pred_check
        _
      $region10: #{tpu_custom_call.1} parent=5 // pred_check_branch
        %155 = sbr.rel (%p152) target = $region12
      $region11: #{tpu_custom_call.1} parent=5 // pred_region
        %s156 = ssub.s32 %s13, 1
      $region12: #{tpu_custom_call.1} parent=5 // pred_fallthru
        _
      %p157 = scmp.lt.s32.totalorder %s13, 12
      // Predicated region
      $region13: #{tpu_custom_call.1} parent=5 // pred_check
        %p158 = pneg %p157
      $region14: #{tpu_custom_call.1} parent=5 // pred_check_branch
        %160 = sbr.rel (%p158) target = $region16
      $region15: #{tpu_custom_call.1} parent=5 // pred_region
        // Predicated region
        $region17: #{tpu_custom_call.1} parent=15 // pred_check
          %p161 = pneg %p54
        $region18: #{tpu_custom_call.1} parent=15 // pred_check_branch
          %163 = sbr.rel (%p161) target = $region20
        $region19: #{tpu_custom_call.1} parent=15 // pred_region
          %s164 = smul.u32 16, %s21
          %p165 = scmp.lt.s32.totalorder %s20, 1
          %s166 = scalar_select %p165, %s20, 1
          %p167 = scmp.lt.s32.totalorder %s164, 31
          %s168 = scalar_select %p167, %s164, 31
          %s169 = smul.addr %s166, 32
          %s170 = sadd.s32 %s168, %s169
          %s171 = smul.addr %s170, 8
          %s172 = scalar_lea.vmem %s0, %s171
          %s173 = smul.u32 16, %s21
        $region20: #{tpu_custom_call.1} parent=15 // pred_fallthru
          _
        // Predicated region
        $region21: #{tpu_custom_call.1} parent=15 // pred_check
          %p174 = pneg %p82
        $region22: #{tpu_custom_call.1} parent=15 // pred_check_branch
          %176 = sbr.rel (%p174) target = $region24
        $region23: #{tpu_custom_call.1} parent=15 // pred_region
          %p177 = scmp.lt.s32.totalorder %s20, 1
          %s178 = scalar_select %p177, %s20, 1
          %p179 = scmp.lt.s32.totalorder %s22, 2
          %s180 = scalar_select %p179, %s22, 2
          %s181 = smul.addr %s178, 3
          %s182 = sadd.s32 %s180, %s181
          %s183 = smul.addr %s182, 4
          %s184 = scalar_lea.vmem %s1, %s183
        $region24: #{tpu_custom_call.1} parent=15 // pred_fallthru
          _
      $region16: #{tpu_custom_call.1} parent=5 // pred_fallthru
        _
      %p185 = scmp.le.s32.totalorder 1, %s13
      %p186 = scmp.lt.s32.totalorder %s13, 13
      %p187 = pnand %p185, %p186
      %p188 = pneg %p187
      // Predicated region
      $region25: #{tpu_custom_call.1} parent=5 // pred_check
        _
      $region26: #{tpu_custom_call.1} parent=5 // pred_check_branch
        %190 = sbr.rel (%p187) target = $region28
      $region27: #{tpu_custom_call.1} parent=5 // pred_region
        %s191 = ssub.s32 %s13, 1
        %s192 = smul.u32 16, %s24
        %p193 = scmp.lt.s32.totalorder %s23, 1
        %s194 = scalar_select %p193, %s23, 1
        %p195 = scmp.lt.s32.totalorder %s192, 31
        %s196 = scalar_select %p195, %s192, 31
        %s197 = smul.addr %s194, 32
        %s198 = sadd.s32 %s196, %s197
        %s199 = smul.addr %s198, 8
        %s200 = scalar_lea.vmem %s0, %s199
        %p201 = pneg %p60
        %p202 = pneg %p57
        %p203 = scmp.lt.s32.totalorder %s23, 1
        %s204 = scalar_select %p203, %s23, 1
        %p205 = scmp.lt.s32.totalorder %s25, 2
        %s206 = scalar_select %p205, %s25, 2
        %s207 = smul.addr %s204, 3
        %s208 = sadd.s32 %s206, %s207
        %s209 = smul.addr %s208, 4
        %s210 = scalar_lea.vmem %s1, %s209
        %p211 = pneg %p88
        %p212 = pneg %p85
        %p213 = pneg %p116
        %p214 = pneg %p113
        %s215 = smul.u32 16, %s24
        %p216 = scmp.lt.s32.totalorder %s23, 1
        %s217 = scalar_select %p216, %s23, 1
        %p218 = scmp.lt.s32.totalorder %s215, 31
        %s219 = scalar_select %p218, %s215, 31
        %s220 = smul.addr %s217, 32
        %s221 = sadd.s32 %s219, %s220
        %s222 = smul.addr %s221, 8
        %s223 = scalar_lea.vmem %s2, %s222
        %p224 = pneg %p142
        %p225 = pneg %p139
        %s226 = sand.u32 %s129, 1
        %s227 = scalar_lea.sflag [#allocation3], %s226
        %s228 = sand.u32 %s129, 1
        %s229 = smul.addr %s228, 3
        %s230 = scalar_lea.vmem [#allocation2], %s229
        %s231 = smul.u32 16, %s24
        %p232 = scmp.lt.s32.totalorder %s23, 1
        %s233 = scalar_select %p232, %s23, 1
        %p234 = scmp.lt.s32.totalorder %s231, 31
        %s235 = scalar_select %p234, %s231, 31
        %s236 = smul.addr %s233, 32
        %s237 = sadd.s32 %s235, %s236
        %s238 = smul.addr %s237, 8
        %s239 = scalar_lea.vmem %s0, %s238
        %s240 = smul.u32 16, %s24
        %p241 = scmp.lt.s32.totalorder %s23, 1
        %s242 = scalar_select %p241, %s23, 1
        %p243 = scmp.lt.s32.totalorder %s25, 2
        %s244 = scalar_select %p243, %s25, 2
        %s245 = smul.addr %s242, 3
        %s246 = sadd.s32 %s244, %s245
        %s247 = smul.addr %s246, 4
        %s248 = scalar_lea.vmem %s1, %s247
        %s249 = smul.u32 16, %s24
        %p250 = scmp.lt.s32.totalorder %s23, 1
        %s251 = scalar_select %p250, %s23, 1
        %p252 = scmp.lt.s32.totalorder %s249, 31
        %s253 = scalar_select %p252, %s249, 31
        %s254 = smul.addr %s251, 32
        %s255 = sadd.s32 %s253, %s254
        %s256 = smul.addr %s255, 8
        %s257 = scalar_lea.vmem %s2, %s256
        %s258 = smul.u32 16, %s24
        %v259 = vld [vmem:[%s239] sm:$0xff]
        %v260 = vld [vmem:[%s239 + $0x8] sm:$0xff]
        %v261 = vld [vmem:[%s239 + $0x10] sm:$0xff]
        %v262 = vld [vmem:[%s239 + $0x18] sm:$0xff]
        %v263 = vld [vmem:[%s239 + $0x20] sm:$0xff]
        %v264 = vld [vmem:[%s239 + $0x28] sm:$0xff]
        %v265 = vld [vmem:[%s239 + $0x30] sm:$0xff]
        %v266 = vld [vmem:[%s239 + $0x38] sm:$0xff]
        %v267 = vld [vmem:[%s239 + $0x40] sm:$0xff]
        %v268 = vld [vmem:[%s239 + $0x48] sm:$0xff]
        %v269 = vld [vmem:[%s239 + $0x50] sm:$0xff]
        %v270 = vld [vmem:[%s239 + $0x58] sm:$0xff]
        %v271 = vld [vmem:[%s239 + $0x60] sm:$0xff]
        %v272 = vld [vmem:[%s239 + $0x68] sm:$0xff]
        %v273 = vld [vmem:[%s239 + $0x70] sm:$0xff]
        %v274 = vld [vmem:[%s239 + $0x78] sm:$0xff]
        %v275 = vld [vmem:[%s248] sm:$0x7]
        %277 = vset.pattern.permute.xlu0 0
        %278 = vperm.xlu0 %277, %v259
        %v279 = vpop.permute.xlu0 %278
        %282 = vset.pattern.permute.xlu0 0
        %283 = vperm.xlu0 %282, %v260
        %v284 = vpop.permute.xlu0 %283
        %287 = vset.pattern.permute.xlu0 0
        %288 = vperm.xlu0 %287, %v261
        %v289 = vpop.permute.xlu0 %288
        %292 = vset.pattern.permute.xlu0 0
        %293 = vperm.xlu0 %292, %v262
        %v294 = vpop.permute.xlu0 %293
        %297 = vset.pattern.permute.xlu0 0
        %298 = vperm.xlu0 %297, %v263
        %v299 = vpop.permute.xlu0 %298
        %302 = vset.pattern.permute.xlu0 0
        %303 = vperm.xlu0 %302, %v264
        %v304 = vpop.permute.xlu0 %303
        %307 = vset.pattern.permute.xlu0 0
        %308 = vperm.xlu0 %307, %v265
        %v309 = vpop.permute.xlu0 %308
        %312 = vset.pattern.permute.xlu0 0
        %313 = vperm.xlu0 %312, %v266
        %v314 = vpop.permute.xlu0 %313
        %317 = vset.pattern.permute.xlu0 0
        %318 = vperm.xlu0 %317, %v267
        %v319 = vpop.permute.xlu0 %318
        %322 = vset.pattern.permute.xlu0 0
        %323 = vperm.xlu0 %322, %v268
        %v324 = vpop.permute.xlu0 %323
        %327 = vset.pattern.permute.xlu0 0
        %328 = vperm.xlu0 %327, %v269
        %v329 = vpop.permute.xlu0 %328
        %332 = vset.pattern.permute.xlu0 0
        %333 = vperm.xlu0 %332, %v270
        %v334 = vpop.permute.xlu0 %333
        %337 = vset.pattern.permute.xlu0 0
        %338 = vperm.xlu0 %337, %v271
        %v339 = vpop.permute.xlu0 %338
        %342 = vset.pattern.permute.xlu0 0
        %343 = vperm.xlu0 %342, %v272
        %v344 = vpop.permute.xlu0 %343
        %347 = vset.pattern.permute.xlu0 0
        %348 = vperm.xlu0 %347, %v273
        %v349 = vpop.permute.xlu0 %348
        %352 = vset.pattern.permute.xlu0 0
        %353 = vperm.xlu0 %352, %v274
        %v354 = vpop.permute.xlu0 %353
        %v356 = vperm.slane %v275, 0
        %v357 = vsub.f32 %v279, %v356
        %v358 = vsub.f32 %v284, %v356
        %v359 = vsub.f32 %v289, %v356
        %v360 = vsub.f32 %v294, %v356
        %v361 = vsub.f32 %v299, %v356
        %v362 = vsub.f32 %v304, %v356
        %v363 = vsub.f32 %v309, %v356
        %v364 = vsub.f32 %v314, %v356
        %v365 = vsub.f32 %v319, %v356
        %v366 = vsub.f32 %v324, %v356
        %v367 = vsub.f32 %v329, %v356
        %v368 = vsub.f32 %v334, %v356
        %v369 = vsub.f32 %v339, %v356
        %v370 = vsub.f32 %v344, %v356
        %v371 = vsub.f32 %v349, %v356
        %v372 = vsub.f32 %v354, %v356
        %v373 = vmul.f32 %v357, %v357
        %v374 = vmul.f32 %v358, %v358
        %v375 = vmul.f32 %v359, %v359
        %v376 = vmul.f32 %v360, %v360
        %v377 = vmul.f32 %v361, %v361
        %v378 = vmul.f32 %v362, %v362
        %v379 = vmul.f32 %v363, %v363
        %v380 = vmul.f32 %v364, %v364
        %v381 = vmul.f32 %v365, %v365
        %v382 = vmul.f32 %v366, %v366
        %v383 = vmul.f32 %v367, %v367
        %v384 = vmul.f32 %v368, %v368
        %v385 = vmul.f32 %v369, %v369
        %v386 = vmul.f32 %v370, %v370
        %v387 = vmul.f32 %v371, %v371
        %v388 = vmul.f32 %v372, %v372
        %389 = vset.pattern.permute.xlu0 1
        %390 = vperm.xlu0 %389, %v259
        %v391 = vpop.permute.xlu0 %390
        %393 = vset.pattern.permute.xlu0 1
        %394 = vperm.xlu0 %393, %v260
        %v395 = vpop.permute.xlu0 %394
        %397 = vset.pattern.permute.xlu0 1
        %398 = vperm.xlu0 %397, %v261
        %v399 = vpop.permute.xlu0 %398
        %401 = vset.pattern.permute.xlu0 1
        %402 = vperm.xlu0 %401, %v262
        %v403 = vpop.permute.xlu0 %402
        %405 = vset.pattern.permute.xlu0 1
        %406 = vperm.xlu0 %405, %v263
        %v407 = vpop.permute.xlu0 %406
        %409 = vset.pattern.permute.xlu0 1
        %410 = vperm.xlu0 %409, %v264
        %v411 = vpop.permute.xlu0 %410
        %413 = vset.pattern.permute.xlu0 1
        %414 = vperm.xlu0 %413, %v265
        %v415 = vpop.permute.xlu0 %414
        %417 = vset.pattern.permute.xlu0 1
        %418 = vperm.xlu0 %417, %v266
        %v419 = vpop.permute.xlu0 %418
        %421 = vset.pattern.permute.xlu0 1
        %422 = vperm.xlu0 %421, %v267
        %v423 = vpop.permute.xlu0 %422
        %425 = vset.pattern.permute.xlu0 1
        %426 = vperm.xlu0 %425, %v268
        %v427 = vpop.permute.xlu0 %426
        %429 = vset.pattern.permute.xlu0 1
        %430 = vperm.xlu0 %429, %v269
        %v431 = vpop.permute.xlu0 %430
        %433 = vset.pattern.permute.xlu0 1
        %434 = vperm.xlu0 %433, %v270
        %v435 = vpop.permute.xlu0 %434
        %437 = vset.pattern.permute.xlu0 1
        %438 = vperm.xlu0 %437, %v271
        %v439 = vpop.permute.xlu0 %438
        %441 = vset.pattern.permute.xlu0 1
        %442 = vperm.xlu0 %441, %v272
        %v443 = vpop.permute.xlu0 %442
        %445 = vset.pattern.permute.xlu0 1
        %446 = vperm.xlu0 %445, %v273
        %v447 = vpop.permute.xlu0 %446
        %449 = vset.pattern.permute.xlu0 1
        %450 = vperm.xlu0 %449, %v274
        %v451 = vpop.permute.xlu0 %450
        %v453 = vperm.slane %v275, 1
        %v454 = vsub.f32 %v391, %v453
        %v455 = vsub.f32 %v395, %v453
        %v456 = vsub.f32 %v399, %v453
        %v457 = vsub.f32 %v403, %v453
        %v458 = vsub.f32 %v407, %v453
        %v459 = vsub.f32 %v411, %v453
        %v460 = vsub.f32 %v415, %v453
        %v461 = vsub.f32 %v419, %v453
        %v462 = vsub.f32 %v423, %v453
        %v463 = vsub.f32 %v427, %v453
        %v464 = vsub.f32 %v431, %v453
        %v465 = vsub.f32 %v435, %v453
        %v466 = vsub.f32 %v439, %v453
        %v467 = vsub.f32 %v443, %v453
        %v468 = vsub.f32 %v447, %v453
        %v469 = vsub.f32 %v451, %v453
        %v470 = vmul.f32 %v454, %v454
        %v471 = vmul.f32 %v455, %v455
        %v472 = vmul.f32 %v456, %v456
        %v473 = vmul.f32 %v457, %v457
        %v474 = vmul.f32 %v458, %v458
        %v475 = vmul.f32 %v459, %v459
        %v476 = vmul.f32 %v460, %v460
        %v477 = vmul.f32 %v461, %v461
        %v478 = vmul.f32 %v462, %v462
        %v479 = vmul.f32 %v463, %v463
        %v480 = vmul.f32 %v464, %v464
        %v481 = vmul.f32 %v465, %v465
        %v482 = vmul.f32 %v466, %v466
        %v483 = vmul.f32 %v467, %v467
        %v484 = vmul.f32 %v468, %v468
        %v485 = vmul.f32 %v469, %v469
        %v486 = vadd.f32 %v373, %v470
        %v487 = vadd.f32 %v374, %v471
        %v488 = vadd.f32 %v375, %v472
        %v489 = vadd.f32 %v376, %v473
        %v490 = vadd.f32 %v377, %v474
        %v491 = vadd.f32 %v378, %v475
        %v492 = vadd.f32 %v379, %v476
        %v493 = vadd.f32 %v380, %v477
        %v494 = vadd.f32 %v381, %v478
        %v495 = vadd.f32 %v382, %v479
        %v496 = vadd.f32 %v383, %v480
        %v497 = vadd.f32 %v384, %v481
        %v498 = vadd.f32 %v385, %v482
        %v499 = vadd.f32 %v386, %v483
        %v500 = vadd.f32 %v387, %v484
        %v501 = vadd.f32 %v388, %v485
        %502 = vset.pattern.permute.xlu0 2
        %503 = vperm.xlu0 %502, %v259
        %v504 = vpop.permute.xlu0 %503
        %506 = vset.pattern.permute.xlu0 2
        %507 = vperm.xlu0 %506, %v260
        %v508 = vpop.permute.xlu0 %507
        %510 = vset.pattern.permute.xlu0 2
        %511 = vperm.xlu0 %510, %v261
        %v512 = vpop.permute.xlu0 %511
        %514 = vset.pattern.permute.xlu0 2
        %515 = vperm.xlu0 %514, %v262
        %v516 = vpop.permute.xlu0 %515
        %518 = vset.pattern.permute.xlu0 2
        %519 = vperm.xlu0 %518, %v263
        %v520 = vpop.permute.xlu0 %519
        %522 = vset.pattern.permute.xlu0 2
        %523 = vperm.xlu0 %522, %v264
        %v524 = vpop.permute.xlu0 %523
        %526 = vset.pattern.permute.xlu0 2
        %527 = vperm.xlu0 %526, %v265
        %v528 = vpop.permute.xlu0 %527
        %530 = vset.pattern.permute.xlu0 2
        %531 = vperm.xlu0 %530, %v266
        %v532 = vpop.permute.xlu0 %531
        %534 = vset.pattern.permute.xlu0 2
        %535 = vperm.xlu0 %534, %v267
        %v536 = vpop.permute.xlu0 %535
        %538 = vset.pattern.permute.xlu0 2
        %539 = vperm.xlu0 %538, %v268
        %v540 = vpop.permute.xlu0 %539
        %542 = vset.pattern.permute.xlu0 2
        %543 = vperm.xlu0 %542, %v269
        %v544 = vpop.permute.xlu0 %543
        %546 = vset.pattern.permute.xlu0 2
        %547 = vperm.xlu0 %546, %v270
        %v548 = vpop.permute.xlu0 %547
        %550 = vset.pattern.permute.xlu0 2
        %551 = vperm.xlu0 %550, %v271
        %v552 = vpop.permute.xlu0 %551
        %554 = vset.pattern.permute.xlu0 2
        %555 = vperm.xlu0 %554, %v272
        %v556 = vpop.permute.xlu0 %555
        %558 = vset.pattern.permute.xlu0 2
        %559 = vperm.xlu0 %558, %v273
        %v560 = vpop.permute.xlu0 %559
        %562 = vset.pattern.permute.xlu0 2
        %563 = vperm.xlu0 %562, %v274
        %v564 = vpop.permute.xlu0 %563
        %v566 = vperm.slane %v275, 2
        %v567 = vsub.f32 %v504, %v566
        %v568 = vsub.f32 %v508, %v566
        %v569 = vsub.f32 %v512, %v566
        %v570 = vsub.f32 %v516, %v566
        %v571 = vsub.f32 %v520, %v566
        %v572 = vsub.f32 %v524, %v566
        %v573 = vsub.f32 %v528, %v566
        %v574 = vsub.f32 %v532, %v566
        %v575 = vsub.f32 %v536, %v566
        %v576 = vsub.f32 %v540, %v566
        %v577 = vsub.f32 %v544, %v566
        %v578 = vsub.f32 %v548, %v566
        %v579 = vsub.f32 %v552, %v566
        %v580 = vsub.f32 %v556, %v566
        %v581 = vsub.f32 %v560, %v566
        %v582 = vsub.f32 %v564, %v566
        %v583 = vmul.f32 %v567, %v567
        %v584 = vmul.f32 %v568, %v568
        %v585 = vmul.f32 %v569, %v569
        %v586 = vmul.f32 %v570, %v570
        %v587 = vmul.f32 %v571, %v571
        %v588 = vmul.f32 %v572, %v572
        %v589 = vmul.f32 %v573, %v573
        %v590 = vmul.f32 %v574, %v574
        %v591 = vmul.f32 %v575, %v575
        %v592 = vmul.f32 %v576, %v576
        %v593 = vmul.f32 %v577, %v577
        %v594 = vmul.f32 %v578, %v578
        %v595 = vmul.f32 %v579, %v579
        %v596 = vmul.f32 %v580, %v580
        %v597 = vmul.f32 %v581, %v581
        %v598 = vmul.f32 %v582, %v582
        %v599 = vadd.f32 %v486, %v583
        %v600 = vadd.f32 %v487, %v584
        %v601 = vadd.f32 %v488, %v585
        %v602 = vadd.f32 %v489, %v586
        %v603 = vadd.f32 %v490, %v587
        %v604 = vadd.f32 %v491, %v588
        %v605 = vadd.f32 %v492, %v589
        %v606 = vadd.f32 %v493, %v590
        %v607 = vadd.f32 %v494, %v591
        %v608 = vadd.f32 %v495, %v592
        %v609 = vadd.f32 %v496, %v593
        %v610 = vadd.f32 %v497, %v594
        %v611 = vadd.f32 %v498, %v595
        %v612 = vadd.f32 %v499, %v596
        %v613 = vadd.f32 %v500, %v597
        %v614 = vadd.f32 %v501, %v598
        %p615 = scmp.eq.s32.totalorder %s25, 0
        // Predicated region
        $region29: #{tpu_custom_call.1} parent=27 // pred_check
          %p616 = pneg %p615
        $region30: #{tpu_custom_call.1} parent=27 // pred_check_branch
          %618 = sbr.rel (%p616) target = $region32
        $region31: #{tpu_custom_call.1} parent=27 // pred_region
          %vm619 = vcmask 7168
          %620 = vst.msk [vmem:[%s257] sm:$0xff] %vm619, inf
          %621 = vst.msk [vmem:[%s257 + $0x8] sm:$0xff] %vm619, inf
          %622 = vst.msk [vmem:[%s257 + $0x10] sm:$0xff] %vm619, inf
          %623 = vst.msk [vmem:[%s257 + $0x18] sm:$0xff] %vm619, inf
          %624 = vst.msk [vmem:[%s257 + $0x20] sm:$0xff] %vm619, inf
          %625 = vst.msk [vmem:[%s257 + $0x28] sm:$0xff] %vm619, inf
          %626 = vst.msk [vmem:[%s257 + $0x30] sm:$0xff] %vm619, inf
          %627 = vst.msk [vmem:[%s257 + $0x38] sm:$0xff] %vm619, inf
          %628 = vst.msk [vmem:[%s257 + $0x40] sm:$0xff] %vm619, inf
          %629 = vst.msk [vmem:[%s257 + $0x48] sm:$0xff] %vm619, inf
          %630 = vst.msk [vmem:[%s257 + $0x50] sm:$0xff] %vm619, inf
          %631 = vst.msk [vmem:[%s257 + $0x58] sm:$0xff] %vm619, inf
          %632 = vst.msk [vmem:[%s257 + $0x60] sm:$0xff] %vm619, inf
          %633 = vst.msk [vmem:[%s257 + $0x68] sm:$0xff] %vm619, inf
          %634 = vst.msk [vmem:[%s257 + $0x70] sm:$0xff] %vm619, inf
          %635 = vst.msk [vmem:[%s257 + $0x78] sm:$0xff] %vm619, inf
        $region32: #{tpu_custom_call.1} parent=27 // pred_fallthru
          _
        %v636 = vld [vmem:[%s257] sm:$0xff]
        %v637 = vld [vmem:[%s257 + $0x8] sm:$0xff]
        %v638 = vld [vmem:[%s257 + $0x10] sm:$0xff]
        %v639 = vld [vmem:[%s257 + $0x18] sm:$0xff]
        %v640 = vld [vmem:[%s257 + $0x20] sm:$0xff]
        %v641 = vld [vmem:[%s257 + $0x28] sm:$0xff]
        %v642 = vld [vmem:[%s257 + $0x30] sm:$0xff]
        %v643 = vld [vmem:[%s257 + $0x38] sm:$0xff]
        %v644 = vld [vmem:[%s257 + $0x40] sm:$0xff]
        %v645 = vld [vmem:[%s257 + $0x48] sm:$0xff]
        %v646 = vld [vmem:[%s257 + $0x50] sm:$0xff]
        %v647 = vld [vmem:[%s257 + $0x58] sm:$0xff]
        %v648 = vld [vmem:[%s257 + $0x60] sm:$0xff]
        %v649 = vld [vmem:[%s257 + $0x68] sm:$0xff]
        %v650 = vld [vmem:[%s257 + $0x70] sm:$0xff]
        %v651 = vld [vmem:[%s257 + $0x78] sm:$0xff]
        %652 = vmin.xlane.f32.xlu0 %v599
        %v653 = vpop.xlane.xlu0 %652
        %654 = vmin.xlane.f32.xlu0 %v600
        %v655 = vpop.xlane.xlu0 %654
        %656 = vmin.xlane.f32.xlu0 %v601
        %v657 = vpop.xlane.xlu0 %656
        %658 = vmin.xlane.f32.xlu0 %v602
        %v659 = vpop.xlane.xlu0 %658
        %660 = vmin.xlane.f32.xlu0 %v603
        %v661 = vpop.xlane.xlu0 %660
        %662 = vmin.xlane.f32.xlu0 %v604
        %v663 = vpop.xlane.xlu0 %662
        %664 = vmin.xlane.f32.xlu0 %v605
        %v665 = vpop.xlane.xlu0 %664
        %666 = vmin.xlane.f32.xlu0 %v606
        %v667 = vpop.xlane.xlu0 %666
        %668 = vmin.xlane.f32.xlu0 %v607
        %v669 = vpop.xlane.xlu0 %668
        %670 = vmin.xlane.f32.xlu0 %v608
        %v671 = vpop.xlane.xlu0 %670
        %672 = vmin.xlane.f32.xlu0 %v609
        %v673 = vpop.xlane.xlu0 %672
        %674 = vmin.xlane.f32.xlu0 %v610
        %v675 = vpop.xlane.xlu0 %674
        %676 = vmin.xlane.f32.xlu0 %v611
        %v677 = vpop.xlane.xlu0 %676
        %678 = vmin.xlane.f32.xlu0 %v612
        %v679 = vpop.xlane.xlu0 %678
        %680 = vmin.xlane.f32.xlu0 %v613
        %v681 = vpop.xlane.xlu0 %680
        %682 = vmin.xlane.f32.xlu0 %v614
        %v683 = vpop.xlane.xlu0 %682
        %v684 = vmin.f32 %v636, %v653
        %v685 = vmin.f32 %v637, %v655
        %v686 = vmin.f32 %v638, %v657
        %v687 = vmin.f32 %v639, %v659
        %v688 = vmin.f32 %v640, %v661
        %v689 = vmin.f32 %v641, %v663
        %v690 = vmin.f32 %v642, %v665
        %v691 = vmin.f32 %v643, %v667
        %v692 = vmin.f32 %v644, %v669
        %v693 = vmin.f32 %v645, %v671
        %v694 = vmin.f32 %v646, %v673
        %v695 = vmin.f32 %v647, %v675
        %v696 = vmin.f32 %v648, %v677
        %v697 = vmin.f32 %v649, %v679
        %v698 = vmin.f32 %v650, %v681
        %v699 = vmin.f32 %v651, %v683
        %vm700 = vcmask 7168
        %701 = vst.msk [vmem:[%s257] sm:$0xff] %vm700, %v684
        %702 = vst.msk [vmem:[%s257 + $0x8] sm:$0xff] %vm700, %v685
        %703 = vst.msk [vmem:[%s257 + $0x10] sm:$0xff] %vm700, %v686
        %704 = vst.msk [vmem:[%s257 + $0x18] sm:$0xff] %vm700, %v687
        %705 = vst.msk [vmem:[%s257 + $0x20] sm:$0xff] %vm700, %v688
        %706 = vst.msk [vmem:[%s257 + $0x28] sm:$0xff] %vm700, %v689
        %707 = vst.msk [vmem:[%s257 + $0x30] sm:$0xff] %vm700, %v690
        %708 = vst.msk [vmem:[%s257 + $0x38] sm:$0xff] %vm700, %v691
        %709 = vst.msk [vmem:[%s257 + $0x40] sm:$0xff] %vm700, %v692
        %710 = vst.msk [vmem:[%s257 + $0x48] sm:$0xff] %vm700, %v693
        %711 = vst.msk [vmem:[%s257 + $0x50] sm:$0xff] %vm700, %v694
        %712 = vst.msk [vmem:[%s257 + $0x58] sm:$0xff] %vm700, %v695
        %713 = vst.msk [vmem:[%s257 + $0x60] sm:$0xff] %vm700, %v696
        %714 = vst.msk [vmem:[%s257 + $0x68] sm:$0xff] %vm700, %v697
        %715 = vst.msk [vmem:[%s257 + $0x70] sm:$0xff] %vm700, %v698
        %716 = vst.msk [vmem:[%s257 + $0x78] sm:$0xff] %vm700, %v699
        %p717 = scmp.eq.s32.totalorder %s24, 0
        %p718 = pnand %p717, %p615
        %p719 = pneg %p718
        // Predicated region
        $region33: #{tpu_custom_call.1} parent=27 // pred_check
          _
        $region34: #{tpu_custom_call.1} parent=27 // pred_check_branch
          %721 = sbr.rel (%p718) target = $region36
        $region35: #{tpu_custom_call.1} parent=27 // pred_region
          %v722 = vlaneseq
          %vm723 = vcmp.ge.s32.totalorder %v722, 0
          %vm724 = vcmp.lt.s32.totalorder %v722, 384
          %vm725 = vmand %vm723, %vm724
          %726 = vst.msk [vmem:[%s230] sm:$0x7] %vm725, inf
        $region36: #{tpu_custom_call.1} parent=27 // pred_fallthru
          _
        %s727 = smul.u32 %s25, 128
        %s728 = sshra.s32 %s727, 7
        %s729 = sand.u32 %s727, 127
        %s730 = scalar_lea.vmem %s230, %s728 [#allocation2]
        %v731 = vld [vmem:[%s730] sm:$0x1]
        %v732 = vmin.f32 %v599, %v603
        %v733 = vmin.f32 %v600, %v604
        %v734 = vmin.f32 %v601, %v605
        %v735 = vmin.f32 %v602, %v606
        %v736 = vmin.f32 %v732, %v607
        %v737 = vmin.f32 %v733, %v608
        %v738 = vmin.f32 %v734, %v609
        %v739 = vmin.f32 %v735, %v610
        %v740 = vmin.f32 %v736, %v611
        %v741 = vmin.f32 %v737, %v612
        %v742 = vmin.f32 %v738, %v613
        %v743 = vmin.f32 %v739, %v614
        %v744 = vmin.f32 %v740, %v741
        %v745 = vmin.f32 %v742, %v743
        %v746 = vmin.f32 %v744, %v745
        %v747 = vrot.slane %v746, 4
        %v748 = vmin.f32 %v746, %v747
        %v749 = vrot.slane %v748, 2
        %v750 = vmin.f32 %v748, %v749
        %v751 = vrot.slane %v750, 1
        %v752 = vmin.f32 %v750, %v751
        %v753 = vmin.f32 %v731, %v752
        %v754 = vlaneseq
        %vm755 = vcmp.ge.s32.totalorder %v754, 0
        %vm756 = vcmp.lt.s32.totalorder %v754, 128
        %vm757 = vmand %vm755, %vm756
        %758 = vst.msk [vmem:[%s730] sm:$0x1] %vm757, %v753
        %s759 = smul.u32 16, %s24
        %p760 = scmp.lt.s32.totalorder %s23, 1
        %s761 = scalar_select %p760, %s23, 1
        %p762 = scmp.lt.s32.totalorder %s759, 31
        %s763 = scalar_select %p762, %s759, 31
        %s764 = smul.addr %s761, 32
        %s765 = sadd.s32 %s763, %s764
        %s766 = smul.addr %s765, 8
        %s767 = scalar_lea.vmem %s2, %s766
        %s768 = sand.u32 %s129, 1
        %s769 = scalar_lea.sflag [#allocation3], %s768
        %s770 = sand.u32 %s129, 1
        %s771 = smul.addr %s770, 3
        %s772 = scalar_lea.vmem [#allocation2], %s771
        // Predicated region
        $region37: #{tpu_custom_call.1} parent=27 // pred_check
          %p773 = pneg %p113
        $region38: #{tpu_custom_call.1} parent=27 // pred_check_branch
          %775 = sbr.rel (%p773) target = $region40
        $region39: #{tpu_custom_call.1} parent=27 // pred_region
          %s776 = smul.u32 16, %s24
        $region40: #{tpu_custom_call.1} parent=27 // pred_fallthru
          _
        // Predicated region
        $region41: #{tpu_custom_call.1} parent=27 // pred_check
          %p777 = pneg %p139
        $region42: #{tpu_custom_call.1} parent=27 // pred_check_branch
          %779 = sbr.rel (%p777) target = $region44
        $region43: #{tpu_custom_call.1} parent=27 // pred_region
          %781 = vsyncadd %s769, 0
          %s782 = smul.addr %s23, 3
          %s783 = scalar_lea.hbm %s3, %s782
          %s785 = sshll.u32 %s772, 4
          %s786 = int_to_ptr.vmem [resolvable:$true] %s785
          %s787 = sshll.u32 %s783, 4
          %s788 = int_to_ptr.hbm [resolvable:$true] %s787
          %790 = dma.vmem_to_hbm [thread:$0]  %s786, 48, %s788, %s769
        $region44: #{tpu_custom_call.1} parent=27 // pred_fallthru
          _
      $region28: #{tpu_custom_call.1} parent=5 // pred_fallthru
        _
      %p791 = scmp.le.s32.totalorder 2, %s13
      // Predicated region
      $region45: #{tpu_custom_call.1} parent=5 // pred_check
        %p792 = pneg %p791
      $region46: #{tpu_custom_call.1} parent=5 // pred_check_branch
        %794 = sbr.rel (%p792) target = $region48
      $region47: #{tpu_custom_call.1} parent=5 // pred_region
        %s795 = ssub.s32 %s13, 2
        // Predicated region
        $region49: #{tpu_custom_call.1} parent=47 // pred_check
          %p796 = pneg %p119
        $region50: #{tpu_custom_call.1} parent=47 // pred_check_branch
          %798 = sbr.rel (%p796) target = $region52
        $region51: #{tpu_custom_call.1} parent=47 // pred_region
          %s799 = smul.u32 16, %s27
          %p800 = scmp.lt.s32.totalorder %s26, 1
          %s801 = scalar_select %p800, %s26, 1
          %p802 = scmp.lt.s32.totalorder %s799, 31
          %s803 = scalar_select %p802, %s799, 31
          %s804 = smul.addr %s801, 32
          %s805 = sadd.s32 %s803, %s804
          %s806 = smul.addr %s805, 8
          %s807 = scalar_lea.vmem %s2, %s806
        $region52: #{tpu_custom_call.1} parent=47 // pred_fallthru
          _
        // Predicated region
        $region53: #{tpu_custom_call.1} parent=47 // pred_check
          %p808 = pneg %p145
        $region54: #{tpu_custom_call.1} parent=47 // pred_check_branch
          %810 = sbr.rel (%p808) target = $region56
        $region55: #{tpu_custom_call.1} parent=47 // pred_region
          %s811 = sand.u32 %s130, 1
          %s812 = scalar_lea.sflag [#allocation3], %s811
          %s813 = sand.u32 %s130, 1
          %s814 = smul.addr %s813, 3
          %s815 = scalar_lea.vmem [#allocation2], %s814
          %817 = dma.done %s812, 48
        $region56: #{tpu_custom_call.1} parent=47 // pred_fallthru
          _
      $region48: #{tpu_custom_call.1} parent=5 // pred_fallthru
        _
    $region6: #{tpu_custom_call.1} parent=1 // loop_footer
      %s17 = sadd.s32 1, %s13
    $region7: #{tpu_custom_call.1} parent=1 // loop_footer_branch
      %12 = sbr.rel target = $region3
    $region8: #{tpu_custom_call.1} parent=1 // loop_exit
      _
    %818 = vsyncpa [#allocation3], 1
    %s819 = scalar_lea.sflag [#allocation3], 1
    %820 = vsyncpa %s819, 1

</llo_original>
